<compile_context>
chip_gen: v7x
topology: tpu7x:2x2x1
jax: 0.10.0
libtpu: 0.0.40
codegen_flags: <defaults>
</compile_context>

<pallas_src>
import dataclasses
import math
from typing import Any

import jax
import jax.numpy as jnp
import numpy as np
from jax.experimental import pallas as pl
from jax.experimental.pallas import tpu as pltpu


def _round_up(x, m):
    return (x + m - 1) // m * m


# --------------------------------------------------------------------------- #
# Kernel: one (tm, tn) output tile; grid axis 2 walks nonzero support blocks.
# --------------------------------------------------------------------------- #
def _spmm_kernel(bidx_ref, bcnt_ref, factor_ref, sup_ref, x_ref, o_ref, acc_ref):
    i = pl.program_id(0)
    k = pl.program_id(2)

    @pl.when(k == 0)
    def _():
        acc_ref[...] = jnp.zeros_like(acc_ref)

    # Only the first bcnt[i] k-steps carry real (nonzero) support tiles; the
    # padded tail of the schedule repeats the last index, so its DMAs are
    # no-ops and its compute is gated off here.
    @pl.when(k < bcnt_ref[i])
    def _():
        acc_ref[...] += jnp.dot(sup_ref[...], x_ref[...],
                                preferred_element_type=jnp.float32)

    @pl.when(k == pl.num_programs(2) - 1)
    def _():
        # Scalar factor (SMEM) applied once per output tile at finalize.
        o_ref[...] = (acc_ref[...] * factor_ref[0]).astype(o_ref.dtype)


# --------------------------------------------------------------------------- #
# One-time, host-side plan: padded (possibly transposed) support + block-CSR
# schedule of nonzero (tm x tk) tiles.  The sparsity pattern of the support is
# a static property of the mesh, so this runs once and is reused every call.
# --------------------------------------------------------------------------- #
@dataclasses.dataclass(frozen=True)
class SpmmPlan:
    support: jax.Array      # (n_pad, n_pad) effective support, compute dtype
    bidx: jax.Array         # (ni * max_cnt,) int32, flattened block-CSR table
    bcnt: jax.Array         # (ni,) int32 nonzero block count per row block
    n: int
    n_pad: int
    tm: int
    tk: int
    max_cnt: int
    nnz_blocks: int
    compute_dtype: Any


def build_spmm_plan(support, *, transpose=False, compute_dtype=jnp.bfloat16,
                    tm=None, tk=None) -> SpmmPlan:
    sup_np = np.asarray(support, dtype=np.float32)      # one-time host copy
    assert sup_np.ndim == 2 and sup_np.shape[0] == sup_np.shape[1], \
        "support must be square (N, N)"
    if transpose:
        # One-time HBM-side transpose instead of a per-k-step in-VMEM one.
        sup_np = np.ascontiguousarray(sup_np.T)
    n = sup_np.shape[0]

    # Tile selection: lane-facing dims multiples of 128; do not fall back to
    # 128-wide contraction tiles just because N is not a multiple of 512.
    n_r = _round_up(n, 128)
    if tk is None:
        tk = min(512, n_r)
    if tm is None:
        tm = 256 if tk % 256 == 0 else 128
    assert tk % 128 == 0 and tm % 128 == 0 and tk % tm == 0

    n_pad = _round_up(n, tk)
    if n_pad != n:
        sup_np = np.pad(sup_np, ((0, n_pad - n), (0, n_pad - n)))

    # Block-CSR schedule over (tm, tk) tiles of the effective support.
    ni, nk = n_pad // tm, n_pad // tk
    blocks = sup_np.reshape(ni, tm, nk, tk)
    mask = np.any(blocks != 0, axis=(1, 3))              # (ni, nk)
    counts = mask.sum(axis=1).astype(np.int32)
    max_cnt = max(int(counts.max()), 1)
    bidx = np.zeros((ni, max_cnt), dtype=np.int32)
    for row in range(ni):
        nz = np.nonzero(mask[row])[0]
        if nz.size:
            bidx[row, :nz.size] = nz
            bidx[row, nz.size:] = nz[-1]   # repeat last -> dead steps skip DMA

    return SpmmPlan(
        support=jnp.asarray(sup_np, dtype=compute_dtype),
        bidx=jnp.asarray(bidx.reshape(-1)),              # 1-D SMEM table
        bcnt=jnp.asarray(counts),
        n=n, n_pad=n_pad, tm=tm, tk=tk, max_cnt=max_cnt,
        nnz_blocks=int(counts.sum()),
        compute_dtype=jnp.dtype(compute_dtype),
    )


# --------------------------------------------------------------------------- #
# Per-call path (jit-traceable): pad/cast x, run the pallas_call, unpad.
# --------------------------------------------------------------------------- #
def spmm_apply(plan: SpmmPlan, x, *, factor=1.0, tn=None):
    n, n_pad, tm, tk, max_cnt = plan.n, plan.n_pad, plan.tm, plan.tk, plan.max_cnt
    assert x.shape[0] == n, "x must be vertex-major with N rows"

    orig_shape = x.shape
    out_dtype = x.dtype
    h = x.reshape(n, -1)
    f = h.shape[1]

    f_r = _round_up(f, 128)
    if tn is None:
        tn = min(512, f_r)
    assert tn % 128 == 0
    f_pad = _round_up(f, tn)

    h_p = h
    if n_pad != n or f_pad != f:
        h_p = jnp.pad(h, ((0, n_pad - n), (0, f_pad - f)))
    h_p = h_p.astype(plan.compute_dtype)

    factor_arr = jnp.asarray(factor, jnp.float32).reshape((1,))

    ni, nj = n_pad // tm, f_pad // tn
    in_bytes = np.dtype(plan.compute_dtype).itemsize
    out_bytes = np.dtype(out_dtype).itemsize
    cost = pl.CostEstimate(
        flops=2 * plan.nnz_blocks * nj * tm * tk * tn,
        transcendentals=0,
        bytes_accessed=(plan.nnz_blocks * nj
                        * (tm * tk * in_bytes + tk * tn * in_bytes)
                        + n_pad * f_pad * out_bytes),
    )

    sup_map = lambda i, j, k, bidx, bcnt: (i, bidx[i * max_cnt + k])
    x_map = lambda i, j, k, bidx, bcnt: (bidx[i * max_cnt + k], j)
    out_map = lambda i, j, k, bidx, bcnt: (i, j)

    out = pl.pallas_call(
        _spmm_kernel,
        out_shape=jax.ShapeDtypeStruct((n_pad, f_pad), out_dtype),
        grid_spec=pltpu.PrefetchScalarGridSpec(
            num_scalar_prefetch=2,
            grid=(ni, nj, max_cnt),
            in_specs=[
                pl.BlockSpec(memory_space=pltpu.MemorySpace.SMEM),  # factor
                pl.BlockSpec((tm, tk), sup_map),                    # support tile
                pl.BlockSpec((tk, tn), x_map),                      # feature tile
            ],
            out_specs=pl.BlockSpec((tm, tn), out_map),
            scratch_shapes=[pltpu.VMEM((tm, tn), jnp.float32)],
        ),
        compiler_params=pltpu.CompilerParams(
            dimension_semantics=("parallel", "parallel", "arbitrary"),
        ),
        cost_estimate=cost,
    )(plan.bidx, plan.bcnt, factor_arr, plan.support, h_p)

    return out[:n, :f].reshape(orig_shape)


def spmm(support, x, *, factor=1.0, transpose=False, repeat=1,
         compute_dtype=jnp.bfloat16, tm=None, tn=None, tk=None):
    """Convenience wrapper: builds the plan and applies it.

    For repeated calls with the same support matrix (the normal model case),
    hoist build_spmm_plan() out and call spmm_apply() directly.
    """
    plan = build_spmm_plan(support, transpose=transpose,
                           compute_dtype=compute_dtype, tm=tm, tk=tk)
    h = x
    # SPMM.__init__ fixes repeat = 1.
    # TODO(synk): if repeat > 1 were ever used, fuse iterations into a single
    # pallas_call (VMEM-resident h) to avoid HBM round-trips of h.
    for _ in range(repeat):
        h = spmm_apply(plan, h, factor=factor, tn=tn)
    return h


# --------------------------------------------------------------------------- #
# Self-test
# --------------------------------------------------------------------------- #
if __name__ == "__main__":
    key = jax.random.PRNGKey(0)
    k_sup, k_x, k_sup2, k_x2 = jax.random.split(key, 4)

    def _q16(a):
        # bf16-quantized inputs, upcast to f64 for an exact-accumulation reference.
        return np.asarray(a, np.float32).astype(jnp.bfloat16).astype(np.float64)

    # --- Case 1: non-tile-aligned graph, dense support, bf16 streaming ------
    n1, feat1 = 100, (3, 5)                       # F = 15 -> padded to 128 lanes
    support1 = jax.random.normal(k_sup, (n1, n1), dtype=jnp.float32)
    x1 = jax.random.normal(k_x, (n1,) + feat1, dtype=jnp.float32)
    plan1 = build_spmm_plan(support1)             # built once, reused below
    out1 = jax.block_until_ready(spmm_apply(plan1, x1, factor=0.5))
    ref1 = (0.5 * (_q16(support1) @ _q16(x1.reshape(n1, -1)))).reshape(x1.shape)
    assert out1.shape == x1.shape and out1.dtype == x1.dtype
    assert jnp.allclose(out1, jnp.asarray(ref1, jnp.float32), atol=5e-3, rtol=5e-3)

    # Same plan, different factor: no schedule rebuild, no recompile.
    out1b = jax.block_until_ready(spmm_apply(plan1, x1, factor=-1.5))
    ref1b = (-1.5 * (_q16(support1) @ _q16(x1.reshape(n1, -1)))).reshape(x1.shape)
    assert jnp.allclose(out1b, jnp.asarray(ref1b, jnp.float32), atol=1e-2, rtol=1e-2)

    # --- Case 2: transposed support (folded into the one-time plan build) ---
    plan1t = build_spmm_plan(support1, transpose=True)
    out2 = jax.block_until_ready(spmm_apply(plan1t, x1, factor=1.0))
    ref2 = (_q16(support1).T @ _q16(x1.reshape(n1, -1))).reshape(x1.shape)
    assert jnp.allclose(out2, jnp.asarray(ref2, jnp.float32), atol=1e-2, rtol=1e-2)

    # --- Case 3: block-sparse support, f32 streaming, forced 128 tiles ------
    n3, feat3 = 256, (8, 16)                      # F = 128
    support3 = jax.random.normal(k_sup2, (n3, n3), dtype=jnp.float32)
    support3 = support3.at[:128, 128:].set(0.0)   # one all-zero (128,128) block
    x3 = jax.random.normal(k_x2, (n3,) + feat3, dtype=jnp.float32)
    out3 = jax.block_until_ready(
        spmm(support3, x3, factor=1.25, transpose=True,
             compute_dtype=jnp.float32, tm=128, tn=128, tk=128))
    ref3 = (1.25 * (np.asarray(support3, np.float64).T
                    @ np.asarray(x3.reshape(n3, -1), np.float64))).reshape(x3.shape)
    assert out3.shape == x3.shape and out3.dtype == x3.dtype
    assert jnp.allclose(out3, jnp.asarray(ref3, jnp.float32), atol=2e-3, rtol=2e-3)

    print("KERNEL_OK")
</pallas_src>

<mosaic_0001>
module attributes {stable_mosaic.version = 11 : i64} {
  func.func @_spmm_kernel(%arg0: i32, %arg1: i32, %arg2: i32, %arg3: memref<1xi32, #tpu.memory_space<smem>>, %arg4: memref<1xi32, #tpu.memory_space<smem>>, %arg5: memref<1xf32, #tpu.memory_space<smem>>, %arg6: memref<128x128xbf16, #tpu.memory_space<vmem>>, %arg7: memref<128x128xbf16, #tpu.memory_space<vmem>>, %arg8: memref<128x128xf32, #tpu.memory_space<vmem>>, %arg9: memref<128x128xf32, #tpu.memory_space<vmem>>) attributes {dimension_semantics = [#tpu.dimension_semantics<parallel>, #tpu.dimension_semantics<parallel>, #tpu.dimension_semantics<arbitrary>], iteration_bounds = array<i64: 1, 1, 1>, scalar_prefetch = 2 : i64, scratch_operands = 1 : i64, tpu.core_type = #tpu.core_type<tc>, window_params = [{transform_indices = @transform_0, window_bounds = array<i64: 1>}, {transform_indices = @transform_1, window_bounds = array<i64: 128, 128>}, {transform_indices = @transform_2, window_bounds = array<i64: 128, 128>}, {transform_indices = @transform_3, window_bounds = array<i64: 128, 128>}]} {
    %c0_i32 = arith.constant 0 : i32
    %0 = arith.cmpi eq, %arg2, %c0_i32 : i32
    %1 = arith.extui %0 : i1 to i32
    %c0_i32_0 = arith.constant 0 : i32
    %2 = arith.cmpi ne, %1, %c0_i32_0 : i32
    scf.if %2 {
      %cst = arith.constant 0.000000e+00 : f32
      %11 = vector.broadcast %cst : f32 to vector<128x128xf32>
      %c0 = arith.constant 0 : index
      %c0_4 = arith.constant 0 : index
      %12 = vector.load %arg9[%c0, %c0_4] : memref<128x128xf32, #tpu.memory_space<vmem>>, vector<128x128xf32>
      tpu.vector_store %arg9[%c0, %c0_4], %11 {strides = array<i32>} : memref<128x128xf32, #tpu.memory_space<vmem>>, vector<128x128xf32>,
    } else {
    }
    %3 = arith.index_cast %arg0 : i32 to index
    %4 = memref.load %arg4[%3] : memref<1xi32, #tpu.memory_space<smem>>
    %5 = arith.cmpi slt, %arg2, %4 : i32
    %6 = arith.extui %5 : i1 to i32
    %c0_i32_1 = arith.constant 0 : i32
    %7 = arith.cmpi ne, %6, %c0_i32_1 : i32
    scf.if %7 {
      %c0 = arith.constant 0 : index
      %c0_4 = arith.constant 0 : index
      %11 = vector.load %arg9[%c0, %c0_4] : memref<128x128xf32, #tpu.memory_space<vmem>>, vector<128x128xf32>
      %c0_5 = arith.constant 0 : index
      %c0_6 = arith.constant 0 : index
      %12 = vector.load %arg6[%c0_5, %c0_6] : memref<128x128xbf16, #tpu.memory_space<vmem>>, vector<128x128xbf16>
      %c0_7 = arith.constant 0 : index
      %c0_8 = arith.constant 0 : index
      %13 = vector.load %arg7[%c0_7, %c0_8] : memref<128x128xbf16, #tpu.memory_space<vmem>>, vector<128x128xbf16>
      %cst = arith.constant dense<0.000000e+00> : vector<128x128xf32>
      %14 = tpu.matmul %12, %13, %cst {dimension_numbers = #tpu.dot_dimension_numbers<[1], [0], [0], [1], [0, 0, 1, 1], [], []>} : vector<128x128xbf16>, vector<128x128xbf16>, vector<128x128xf32> -> vector<128x128xf32>
      %15 = arith.addf %11, %14 : vector<128x128xf32>
      %c0_9 = arith.constant 0 : index
      %c0_10 = arith.constant 0 : index
      %16 = vector.load %arg9[%c0_9, %c0_10] : memref<128x128xf32, #tpu.memory_space<vmem>>, vector<128x128xf32>
      tpu.vector_store %arg9[%c0_9, %c0_10], %15 {strides = array<i32>} : memref<128x128xf32, #tpu.memory_space<vmem>>, vector<128x128xf32>,
    } else {
    }
    %c0_i32_2 = arith.constant 0 : i32
    %8 = arith.cmpi eq, %arg2, %c0_i32_2 : i32
    %9 = arith.extui %8 : i1 to i32
    %c0_i32_3 = arith.constant 0 : i32
    %10 = arith.cmpi ne, %9, %c0_i32_3 : i32
    scf.if %10 {
      %c0 = arith.constant 0 : index
      %c0_4 = arith.constant 0 : index
      %11 = vector.load %arg9[%c0, %c0_4] : memref<128x128xf32, #tpu.memory_space<vmem>>, vector<128x128xf32>
      %c0_5 = arith.constant 0 : index
      %12 = memref.load %arg5[%c0_5] : memref<1xf32, #tpu.memory_space<smem>>
      %13 = vector.broadcast %12 : f32 to vector<128x128xf32>
      %14 = arith.mulf %11, %13 : vector<128x128xf32>
      %c0_6 = arith.constant 0 : index
      %c0_7 = arith.constant 0 : index
      %15 = vector.load %arg8[%c0_6, %c0_7] : memref<128x128xf32, #tpu.memory_space<vmem>>, vector<128x128xf32>
      tpu.vector_store %arg8[%c0_6, %c0_7], %14 {strides = array<i32>} : memref<128x128xf32, #tpu.memory_space<vmem>>, vector<128x128xf32>,
    } else {
    }
    return
  }
  func.func @transform_0(%arg0: i32, %arg1: i32, %arg2: i32, %arg3: memref<1xi32, #tpu.memory_space<smem>>, %arg4: memref<1xi32, #tpu.memory_space<smem>>) -> i32 {
    %c0_i32 = arith.constant 0 : i32
    %c0_i32_0 = arith.constant 0 : i32
    return %c0_i32 : i32
  }
  func.func @transform_1(%arg0: i32, %arg1: i32, %arg2: i32, %arg3: memref<1xi32, #tpu.memory_space<smem>>, %arg4: memref<1xi32, #tpu.memory_space<smem>>) -> (i32, i32) {
    %c1_i32 = arith.constant 1 : i32
    %0 = arith.muli %arg0, %c1_i32 : i32
    %1 = arith.addi %0, %arg2 : i32
    %2 = arith.index_cast %1 : i32 to index
    %3 = memref.load %arg3[%2] : memref<1xi32, #tpu.memory_space<smem>>
    %c0_i32 = arith.constant 0 : i32
    return %arg0, %3 : i32, i32
  }
  func.func @transform_2(%arg0: i32, %arg1: i32, %arg2: i32, %arg3: memref<1xi32, #tpu.memory_space<smem>>, %arg4: memref<1xi32, #tpu.memory_space<smem>>) -> (i32, i32) {
    %c1_i32 = arith.constant 1 : i32
    %0 = arith.muli %arg0, %c1_i32 : i32
    %1 = arith.addi %0, %arg2 : i32
    %2 = arith.index_cast %1 : i32 to index
    %3 = memref.load %arg3[%2] : memref<1xi32, #tpu.memory_space<smem>>
    %c0_i32 = arith.constant 0 : i32
    return %3, %arg1 : i32, i32
  }
  func.func @transform_3(%arg0: i32, %arg1: i32, %arg2: i32, %arg3: memref<1xi32, #tpu.memory_space<smem>>, %arg4: memref<1xi32, #tpu.memory_space<smem>>) -> (i32, i32) {
    %c0_i32 = arith.constant 0 : i32
    return %arg0, %arg1 : i32, i32
  }
}

</mosaic_0001>

<llo_original>
// kernel: tpu_custom_call.1
$region0: #{tpu_custom_call.1}
  #allocation0 [shape = 'u32[]', space=smem, size = 0x4, offset = 0x4, fixed_abs, tag = 'smem constant byte address 0x4 - core index']
  #allocation1 [shape = 'u32[144,128]{1,0:T(1,128)}', space=vmem, size = 0x12000, scoped, tag = 'internal scratch']
  #allocation2 [shape = 'f32[128,128]{1,0:T(8,128)}', space=vmem, size = 0x10000, scoped, tag = 'scratch operand']
  #allocation3 [shape = 's32[1]{0}', space=sflag, size = 0x4, scoped, tag = 'scoped memory for tpu_custom_call.1']
  #allocation4 [shape = 's32[1]{0:T(128)S(6)}', space=smem, size = 0x200, scoped, tag = 'prefetched SMEM operand 0']
  #allocation5 [shape = 's32[1]{0:T(128)S(6)}', space=smem, size = 0x200, scoped, tag = 'prefetched SMEM operand 1']
  #allocation6 [shape = 'f32[1]{0:T(128)S(6)}', space=smem, size = 0x200, scoped, tag = 'scoped memory for tpu_custom_call.1']
  %s0 = inlined_call_operand.<no memory space> [shape: s32[1], index: 0, kind: input, shape index: {}]
  %s1 = inlined_call_operand.<no memory space> [shape: s32[1], index: 1, kind: input, shape index: {}]
  %s2 = inlined_call_operand.<no memory space> [shape: f32[1], index: 2, kind: input, shape index: {}]
  %s3 = inlined_call_operand.hbm [shape: bf16[128,128], index: 3, kind: input, shape index: {}]
  %s4 = inlined_call_operand.hbm [shape: bf16[128,128], index: 4, kind: input, shape index: {}]
  %s5 = inlined_call_operand.hbm [shape: f32[128,128], index: 5, kind: output, shape index: {}]
  %s6 = sld [smem:[#allocation0]]
  $region42: #{tpu_custom_call.1} parent=0
    _
  %s8 = ssub.s32 1, %s6
  %s9 = scalar_select 0, %s8, %s6
  %10 = sst [smem:[#allocation4]] %s0
  %11 = sst [smem:[#allocation5]] %s1
  %12 = sst [smem:[#allocation6]] %s2
  $region1: #{tpu_custom_call.1} parent=0
    #allocation7 [shape = 'u8[32768]{0}', space=vmem, size = 0x8000, scoped, tag = 'input window, operand 3, single buffered']
    #allocation8 [shape = 's32[1]{0}', space=sflag, size = 0x4, scoped, tag = 'scoped memory for tpu_custom_call.1']
    #allocation9 [shape = 's32[1]{0}', space=sflag, size = 0x4, scoped, tag = 'scoped memory for tpu_custom_call.1']
    #allocation10 [shape = 'u8[32768]{0}', space=vmem, size = 0x8000, scoped, tag = 'input window, operand 4, single buffered']
    #allocation11 [shape = 's32[1]{0}', space=sflag, size = 0x4, scoped, tag = 'scoped memory for tpu_custom_call.1']
    #allocation12 [shape = 'u8[65536]{0}', space=vmem, size = 0x10000, scoped, tag = 'output window, operand 0, single buffered']
    %13 = vsyncpa [#allocation8], 0
    %14 = vsyncpa [#allocation11], 0
    %15 = vsyncpa [#allocation9], 0
    // Predicated region
    $region2: #{tpu_custom_call.1} parent=1 // pred_check
      _
    $region3: #{tpu_custom_call.1} parent=1 // pred_check_branch
      %17 = sbr.rel (0) target = $region5
    $region4: #{tpu_custom_call.1} parent=1 // pred_region
      _
    $region5: #{tpu_custom_call.1} parent=1 // pred_fallthru
      _
    // Predicated region
    $region6: #{tpu_custom_call.1} parent=1 // pred_check
      _
    $region7: #{tpu_custom_call.1} parent=1 // pred_check_branch
      %19 = sbr.rel (0) target = $region9
    $region8: #{tpu_custom_call.1} parent=1 // pred_region
      %s20 = sadd.s32 0, 0
      %s21 = sld [smem:[#allocation4 + %s20]]
      %s23 = ssub.s32 1024, 1024
      %24 = vsyncadd [#allocation8], %s23
      %s25 = smul.addr %s21, 64
      %s26 = scalar_lea.hbm %s3, %s25
      %s27 = sshll.u32 [#allocation7], 4
      %s28 = int_to_ptr.vmem [resolvable:$true] %s27
      %33 = dma.hbm_to_vmem [thread:$0]  %s26, 1024, %s28, [#allocation8], 64, 64, 4
    $region9: #{tpu_custom_call.1} parent=1 // pred_fallthru
      _
    // Predicated region
    $region10: #{tpu_custom_call.1} parent=1 // pred_check
      _
    $region11: #{tpu_custom_call.1} parent=1 // pred_check_branch
      %35 = sbr.rel (0) target = $region13
    $region12: #{tpu_custom_call.1} parent=1 // pred_region
      %s36 = sadd.s32 0, 0
      %s37 = sld [smem:[#allocation4 + %s36]]
      %s38 = smul.u32 16, %s37
      %s40 = ssub.s32 1024, 1024
      %41 = vsyncadd [#allocation11], %s40
      %s42 = smul.addr %s38, 64
      %s43 = scalar_lea.hbm %s4, %s42
      %s44 = sshll.u32 [#allocation10], 4
      %s45 = int_to_ptr.vmem [resolvable:$true] %s44
      %50 = dma.hbm_to_vmem [thread:$0]  %s43, 1024, %s45, [#allocation11], 64, 64, 4
    $region13: #{tpu_custom_call.1} parent=1 // pred_fallthru
      _
    // Predicated region
    $region14: #{tpu_custom_call.1} parent=1 // pred_check
      _
    $region15: #{tpu_custom_call.1} parent=1 // pred_check_branch
      %52 = sbr.rel (0) target = $region17
    $region16: #{tpu_custom_call.1} parent=1 // pred_region
      %53 = dma.done [#allocation8], 1024
    $region17: #{tpu_custom_call.1} parent=1 // pred_fallthru
      _
    // Predicated region
    $region18: #{tpu_custom_call.1} parent=1 // pred_check
      _
    $region19: #{tpu_custom_call.1} parent=1 // pred_check_branch
      %55 = sbr.rel (0) target = $region21
    $region20: #{tpu_custom_call.1} parent=1 // pred_region
      %56 = dma.done [#allocation11], 1024
    $region21: #{tpu_custom_call.1} parent=1 // pred_fallthru
      _
    %s57 = sadd.s32 0, 0
    %s58 = sld [smem:[#allocation4 + %s57]]
    %s59 = sadd.s32 0, 0
    %s60 = sld [smem:[#allocation4 + %s59]]
    %s61 = smul.u32 16, %s60
    %p63 = scmp.eq.s32.totalorder 0, 0
    // Predicated region
    $region22: #{tpu_custom_call.1} parent=1 // pred_check
      %p64 = pneg %p63
    $region23: #{tpu_custom_call.1} parent=1 // pred_check_branch
      %66 = sbr.rel (%p64) target = $region25
    $region24: #{tpu_custom_call.1} parent=1 // pred_region
      %67 = vst [vmem:[#allocation2] sm:$0xff] 0.0
      %68 = vst [vmem:[#allocation2 + $0x8] sm:$0xff] 0.0
      %69 = vst [vmem:[#allocation2 + $0x10] sm:$0xff] 0.0
      %70 = vst [vmem:[#allocation2 + $0x18] sm:$0xff] 0.0
      %71 = vst [vmem:[#allocation2 + $0x20] sm:$0xff] 0.0
      %72 = vst [vmem:[#allocation2 + $0x28] sm:$0xff] 0.0
      %73 = vst [vmem:[#allocation2 + $0x30] sm:$0xff] 0.0
      %74 = vst [vmem:[#allocation2 + $0x38] sm:$0xff] 0.0
      %75 = vst [vmem:[#allocation2 + $0x40] sm:$0xff] 0.0
      %76 = vst [vmem:[#allocation2 + $0x48] sm:$0xff] 0.0
      %77 = vst [vmem:[#allocation2 + $0x50] sm:$0xff] 0.0
      %78 = vst [vmem:[#allocation2 + $0x58] sm:$0xff] 0.0
      %79 = vst [vmem:[#allocation2 + $0x60] sm:$0xff] 0.0
      %80 = vst [vmem:[#allocation2 + $0x68] sm:$0xff] 0.0
      %81 = vst [vmem:[#allocation2 + $0x70] sm:$0xff] 0.0
      %82 = vst [vmem:[#allocation2 + $0x78] sm:$0xff] 0.0
    $region25: #{tpu_custom_call.1} parent=1 // pred_fallthru
      _
    %s83 = sld [smem:[#allocation5]]
    %p84 = scmp.lt.s32.totalorder 0, %s83
    // Predicated region
    $region26: #{tpu_custom_call.1} parent=1 // pred_check
      %p85 = pneg %p84
    $region27: #{tpu_custom_call.1} parent=1 // pred_check_branch
      %87 = sbr.rel (%p85) target = $region29
    $region28: #{tpu_custom_call.1} parent=1 // pred_region
      %v88 = vld [vmem:[#allocation2] sm:$0xff]
      %v89 = vld [vmem:[#allocation2 + $0x8] sm:$0xff]
      %v90 = vld [vmem:[#allocation2 + $0x10] sm:$0xff]
      %v91 = vld [vmem:[#allocation2 + $0x18] sm:$0xff]
      %v92 = vld [vmem:[#allocation2 + $0x20] sm:$0xff]
      %v93 = vld [vmem:[#allocation2 + $0x28] sm:$0xff]
      %v94 = vld [vmem:[#allocation2 + $0x30] sm:$0xff]
      %v95 = vld [vmem:[#allocation2 + $0x38] sm:$0xff]
      %v96 = vld [vmem:[#allocation2 + $0x40] sm:$0xff]
      %v97 = vld [vmem:[#allocation2 + $0x48] sm:$0xff]
      %v98 = vld [vmem:[#allocation2 + $0x50] sm:$0xff]
      %v99 = vld [vmem:[#allocation2 + $0x58] sm:$0xff]
      %v100 = vld [vmem:[#allocation2 + $0x60] sm:$0xff]
      %v101 = vld [vmem:[#allocation2 + $0x68] sm:$0xff]
      %v102 = vld [vmem:[#allocation2 + $0x70] sm:$0xff]
      %v103 = vld [vmem:[#allocation2 + $0x78] sm:$0xff]
      %v104 = vld [vmem:[#allocation7] sm:$0xf]
      %v105 = vld [vmem:[#allocation7 + $0x4] sm:$0xf]
      %v106 = vld [vmem:[#allocation7 + $0x8] sm:$0xf]
      %v107 = vld [vmem:[#allocation7 + $0xc] sm:$0xf]
      %v108 = vld [vmem:[#allocation7 + $0x10] sm:$0xf]
      %v109 = vld [vmem:[#allocation7 + $0x14] sm:$0xf]
      %v110 = vld [vmem:[#allocation7 + $0x18] sm:$0xf]
      %v111 = vld [vmem:[#allocation7 + $0x1c] sm:$0xf]
      %v112 = vld [vmem:[#allocation7 + $0x20] sm:$0xf]
      %v113 = vld [vmem:[#allocation7 + $0x24] sm:$0xf]
      %v114 = vld [vmem:[#allocation7 + $0x28] sm:$0xf]
      %v115 = vld [vmem:[#allocation7 + $0x2c] sm:$0xf]
      %v116 = vld [vmem:[#allocation7 + $0x30] sm:$0xf]
      %v117 = vld [vmem:[#allocation7 + $0x34] sm:$0xf]
      %v118 = vld [vmem:[#allocation7 + $0x38] sm:$0xf]
      %v119 = vld [vmem:[#allocation7 + $0x3c] sm:$0xf]
      %v120 = vld [vmem:[#allocation10] sm:$0xf]
      %v121 = vld [vmem:[#allocation10 + $0x4] sm:$0xf]
      %v122 = vld [vmem:[#allocation10 + $0x8] sm:$0xf]
      %v123 = vld [vmem:[#allocation10 + $0xc] sm:$0xf]
      %v124 = vld [vmem:[#allocation10 + $0x10] sm:$0xf]
      %v125 = vld [vmem:[#allocation10 + $0x14] sm:$0xf]
      %v126 = vld [vmem:[#allocation10 + $0x18] sm:$0xf]
      %v127 = vld [vmem:[#allocation10 + $0x1c] sm:$0xf]
      %v128 = vld [vmem:[#allocation10 + $0x20] sm:$0xf]
      %v129 = vld [vmem:[#allocation10 + $0x24] sm:$0xf]
      %v130 = vld [vmem:[#allocation10 + $0x28] sm:$0xf]
      %v131 = vld [vmem:[#allocation10 + $0x2c] sm:$0xf]
      %v132 = vld [vmem:[#allocation10 + $0x30] sm:$0xf]
      %v133 = vld [vmem:[#allocation10 + $0x34] sm:$0xf]
      %v134 = vld [vmem:[#allocation10 + $0x38] sm:$0xf]
      %v135 = vld [vmem:[#allocation10 + $0x3c] sm:$0xf]
      %v152 = vunpack.c.l.b16 %v104
      %v153 = vunpack.c.l.b16 %v105
      %v154 = vunpack.c.l.b16 %v106
      %v155 = vunpack.c.l.b16 %v107
      %v156 = vunpack.c.l.b16 %v108
      %v157 = vunpack.c.l.b16 %v109
      %v158 = vunpack.c.l.b16 %v110
      %v159 = vunpack.c.l.b16 %v111
      %v160 = vunpack.c.l.b16 %v112
      %v161 = vunpack.c.l.b16 %v113
      %v162 = vunpack.c.l.b16 %v114
      %v163 = vunpack.c.l.b16 %v115
      %v164 = vunpack.c.l.b16 %v116
      %v165 = vunpack.c.l.b16 %v117
      %v166 = vunpack.c.l.b16 %v118
      %v167 = vunpack.c.l.b16 %v119
      %v168 = vpack.c.b16 %v153, %v152
      %v169 = vpack.c.b16 %v155, %v154
      %v170 = vpack.c.b16 %v157, %v156
      %v171 = vpack.c.b16 %v159, %v158
      %v172 = vpack.c.b16 %v161, %v160
      %v173 = vpack.c.b16 %v163, %v162
      %v174 = vpack.c.b16 %v165, %v164
      %v175 = vpack.c.b16 %v167, %v166
      %v200 = vunpack.c.l.b16 %v120
      %v201 = vunpack.c.l.b16 %v121
      %v202 = vunpack.c.l.b16 %v122
      %v203 = vunpack.c.l.b16 %v123
      %v204 = vunpack.c.l.b16 %v124
      %v205 = vunpack.c.l.b16 %v125
      %v206 = vunpack.c.l.b16 %v126
      %v207 = vunpack.c.l.b16 %v127
      %v208 = vunpack.c.l.b16 %v128
      %v209 = vunpack.c.l.b16 %v129
      %v210 = vunpack.c.l.b16 %v130
      %v211 = vunpack.c.l.b16 %v131
      %v212 = vunpack.c.l.b16 %v132
      %v213 = vunpack.c.l.b16 %v133
      %v214 = vunpack.c.l.b16 %v134
      %v215 = vunpack.c.l.b16 %v135
      %v216 = vpack.c.b16 %v201, %v200
      %v217 = vpack.c.b16 %v203, %v202
      %v218 = vpack.c.b16 %v205, %v204
      %v219 = vpack.c.b16 %v207, %v206
      %v220 = vpack.c.b16 %v209, %v208
      %v221 = vpack.c.b16 %v211, %v210
      %v222 = vpack.c.b16 %v213, %v212
      %v223 = vpack.c.b16 %v215, %v214
      %232 = vmatprep.subr.bf16.mxu0 0
      %233 = vmatpush1.bf16.msra.mxu0 %v216
      %234 = vmatprep.subr.bf16.mxu0 0
      %235 = vmatpush1.bf16.msra.mxu0 %v217
      %236 = vmatprep.subr.bf16.mxu0 0
      %237 = vmatpush1.bf16.msra.mxu0 %v218
      %238 = vmatprep.subr.bf16.mxu0 0
      %239 = vmatpush1.bf16.msra.mxu0 %v219
      %240 = vmatprep.subr.bf16.mxu0 0
      %241 = vmatpush1.bf16.msra.mxu0 %v220
      %242 = vmatprep.subr.bf16.mxu0 0
      %243 = vmatpush1.bf16.msra.mxu0 %v221
      %244 = vmatprep.subr.bf16.mxu0 0
      %245 = vmatpush1.bf16.msra.mxu0 %v222
      %246 = vmatprep.subr.bf16.mxu0 0
      %247 = vmatpush1.bf16.msra.mxu0 %v223
      %248 = vmatprep.subr.bf16.mxu0 0
      %249 = vmatpush1.bf16.msra.mxu0 0
      %250 = vmatprep.subr.bf16.mxu0 0
      %251 = vmatpush1.bf16.msra.mxu0 0
      %252 = vmatprep.subr.bf16.mxu0 0
      %253 = vmatpush1.bf16.msra.mxu0 0
      %254 = vmatprep.subr.bf16.mxu0 0
      %255 = vmatpush1.bf16.msra.mxu0 0
      %256 = vmatprep.subr.bf16.mxu0 0
      %257 = vmatpush1.bf16.msra.mxu0 0
      %258 = vmatprep.subr.bf16.mxu0 0
      %259 = vmatpush1.bf16.msra.mxu0 0
      %260 = vmatprep.subr.bf16.mxu0 0
      %261 = vmatpush1.bf16.msra.mxu0 0
      %262 = vmatprep.subr.bf16.mxu0 0
      %263 = vmatpush1.bf16.msra.mxu0 0
      %264 = vmatprep.mubr.bf16.mxu0 0
      %265 = vmatmul.mubr.bf16.gmra.mrb[0].mxu0 %v168
      %v266 = vpop.f32.mrb[0].mxu0
      %v267 = vadd.f32 0.0, %v266
      %v268 = vpop.f32.mrb[0].mxu0
      %v269 = vpop.f32.mrb[0].mxu0
      %v270 = vadd.f32 0.0, %v269
      %v271 = vpop.f32.mrb[0].mxu0
      %272 = vmatprep.mubr.bf16.mxu0 0
      %273 = vmatmul.mubr.bf16.gmra.mrb[0].mxu0 %v169
      %v274 = vpop.f32.mrb[0].mxu0
      %v275 = vadd.f32 0.0, %v274
      %v276 = vpop.f32.mrb[0].mxu0
      %v277 = vpop.f32.mrb[0].mxu0
      %v278 = vadd.f32 0.0, %v277
      %v279 = vpop.f32.mrb[0].mxu0
      %280 = vmatprep.mubr.bf16.mxu0 0
      %281 = vmatmul.mubr.bf16.gmra.mrb[0].mxu0 %v170
      %v282 = vpop.f32.mrb[0].mxu0
      %v283 = vadd.f32 0.0, %v282
      %v284 = vpop.f32.mrb[0].mxu0
      %v285 = vpop.f32.mrb[0].mxu0
      %v286 = vadd.f32 0.0, %v285
      %v287 = vpop.f32.mrb[0].mxu0
      %288 = vmatprep.mubr.bf16.mxu0 0
      %289 = vmatmul.mubr.bf16.gmra.mrb[0].mxu0 %v171
      %v290 = vpop.f32.mrb[0].mxu0
      %v291 = vadd.f32 0.0, %v290
      %v292 = vpop.f32.mrb[0].mxu0
      %v293 = vpop.f32.mrb[0].mxu0
      %v294 = vadd.f32 0.0, %v293
      %v295 = vpop.f32.mrb[0].mxu0
      %296 = vmatprep.mubr.bf16.mxu0 0
      %297 = vmatmul.mubr.bf16.gmra.mrb[0].mxu0 %v172
      %v298 = vpop.f32.mrb[0].mxu0
      %v299 = vadd.f32 0.0, %v298
      %v300 = vpop.f32.mrb[0].mxu0
      %v301 = vpop.f32.mrb[0].mxu0
      %v302 = vadd.f32 0.0, %v301
      %v303 = vpop.f32.mrb[0].mxu0
      %304 = vmatprep.mubr.bf16.mxu0 0
      %305 = vmatmul.mubr.bf16.gmra.mrb[0].mxu0 %v173
      %v306 = vpop.f32.mrb[0].mxu0
      %v307 = vadd.f32 0.0, %v306
      %v308 = vpop.f32.mrb[0].mxu0
      %v309 = vpop.f32.mrb[0].mxu0
      %v310 = vadd.f32 0.0, %v309
      %v311 = vpop.f32.mrb[0].mxu0
      %312 = vmatprep.mubr.bf16.mxu0 0
      %313 = vmatmul.mubr.bf16.gmra.mrb[0].mxu0 %v174
      %v314 = vpop.f32.mrb[0].mxu0
      %v315 = vadd.f32 0.0, %v314
      %v316 = vpop.f32.mrb[0].mxu0
      %v317 = vpop.f32.mrb[0].mxu0
      %v318 = vadd.f32 0.0, %v317
      %v319 = vpop.f32.mrb[0].mxu0
      %320 = vmatprep.mubr.bf16.mxu0 0
      %321 = vmatmul.mubr.bf16.gmra.mrb[0].mxu0 %v175
      %v322 = vpop.f32.mrb[0].mxu0
      %v323 = vadd.f32 0.0, %v322
      %v324 = vpop.f32.mrb[0].mxu0
      %v325 = vpop.f32.mrb[0].mxu0
      %v326 = vadd.f32 0.0, %v325
      %v327 = vpop.f32.mrb[0].mxu0
      %328 = vdwg.mxu0
      %v329 = vadd.f32 %v88, %v267
      %v330 = vadd.f32 %v89, %v270
      %v331 = vadd.f32 %v90, %v275
      %v332 = vadd.f32 %v91, %v278
      %v333 = vadd.f32 %v92, %v283
      %v334 = vadd.f32 %v93, %v286
      %v335 = vadd.f32 %v94, %v291
      %v336 = vadd.f32 %v95, %v294
      %v337 = vadd.f32 %v96, %v299
      %v338 = vadd.f32 %v97, %v302
      %v339 = vadd.f32 %v98, %v307
      %v340 = vadd.f32 %v99, %v310
      %v341 = vadd.f32 %v100, %v315
      %v342 = vadd.f32 %v101, %v318
      %v343 = vadd.f32 %v102, %v323
      %v344 = vadd.f32 %v103, %v326
      %345 = vst [vmem:[#allocation2] sm:$0xff] %v329
      %346 = vst [vmem:[#allocation2 + $0x8] sm:$0xff] %v330
      %347 = vst [vmem:[#allocation2 + $0x10] sm:$0xff] %v331
      %348 = vst [vmem:[#allocation2 + $0x18] sm:$0xff] %v332
      %349 = vst [vmem:[#allocation2 + $0x20] sm:$0xff] %v333
      %350 = vst [vmem:[#allocation2 + $0x28] sm:$0xff] %v334
      %351 = vst [vmem:[#allocation2 + $0x30] sm:$0xff] %v335
      %352 = vst [vmem:[#allocation2 + $0x38] sm:$0xff] %v336
      %353 = vst [vmem:[#allocation2 + $0x40] sm:$0xff] %v337
      %354 = vst [vmem:[#allocation2 + $0x48] sm:$0xff] %v338
      %355 = vst [vmem:[#allocation2 + $0x50] sm:$0xff] %v339
      %356 = vst [vmem:[#allocation2 + $0x58] sm:$0xff] %v340
      %357 = vst [vmem:[#allocation2 + $0x60] sm:$0xff] %v341
      %358 = vst [vmem:[#allocation2 + $0x68] sm:$0xff] %v342
      %359 = vst [vmem:[#allocation2 + $0x70] sm:$0xff] %v343
      %360 = vst [vmem:[#allocation2 + $0x78] sm:$0xff] %v344
    $region29: #{tpu_custom_call.1} parent=1 // pred_fallthru
      _
    // Predicated region
    $region30: #{tpu_custom_call.1} parent=1 // pred_check
      %p361 = pneg %p63
    $region31: #{tpu_custom_call.1} parent=1 // pred_check_branch
      %363 = sbr.rel (%p361) target = $region33
    $region32: #{tpu_custom_call.1} parent=1 // pred_region
      %v364 = vld [vmem:[#allocation2] sm:$0xff]
      %v365 = vld [vmem:[#allocation2 + $0x8] sm:$0xff]
      %v366 = vld [vmem:[#allocation2 + $0x10] sm:$0xff]
      %v367 = vld [vmem:[#allocation2 + $0x18] sm:$0xff]
      %v368 = vld [vmem:[#allocation2 + $0x20] sm:$0xff]
      %v369 = vld [vmem:[#allocation2 + $0x28] sm:$0xff]
      %v370 = vld [vmem:[#allocation2 + $0x30] sm:$0xff]
      %v371 = vld [vmem:[#allocation2 + $0x38] sm:$0xff]
      %v372 = vld [vmem:[#allocation2 + $0x40] sm:$0xff]
      %v373 = vld [vmem:[#allocation2 + $0x48] sm:$0xff]
      %v374 = vld [vmem:[#allocation2 + $0x50] sm:$0xff]
      %v375 = vld [vmem:[#allocation2 + $0x58] sm:$0xff]
      %v376 = vld [vmem:[#allocation2 + $0x60] sm:$0xff]
      %v377 = vld [vmem:[#allocation2 + $0x68] sm:$0xff]
      %v378 = vld [vmem:[#allocation2 + $0x70] sm:$0xff]
      %v379 = vld [vmem:[#allocation2 + $0x78] sm:$0xff]
      %s380 = sld [smem:[#allocation6]]
      %v381 = vstv %s380
      %v382 = vmul.f32 %v364, %v381
      %v383 = vmul.f32 %v365, %v381
      %v384 = vmul.f32 %v366, %v381
      %v385 = vmul.f32 %v367, %v381
      %v386 = vmul.f32 %v368, %v381
      %v387 = vmul.f32 %v369, %v381
      %v388 = vmul.f32 %v370, %v381
      %v389 = vmul.f32 %v371, %v381
      %v390 = vmul.f32 %v372, %v381
      %v391 = vmul.f32 %v373, %v381
      %v392 = vmul.f32 %v374, %v381
      %v393 = vmul.f32 %v375, %v381
      %v394 = vmul.f32 %v376, %v381
      %v395 = vmul.f32 %v377, %v381
      %v396 = vmul.f32 %v378, %v381
      %v397 = vmul.f32 %v379, %v381
      %398 = vst [vmem:[#allocation12] sm:$0xff] %v382
      %399 = vst [vmem:[#allocation12 + $0x8] sm:$0xff] %v383
      %400 = vst [vmem:[#allocation12 + $0x10] sm:$0xff] %v384
      %401 = vst [vmem:[#allocation12 + $0x18] sm:$0xff] %v385
      %402 = vst [vmem:[#allocation12 + $0x20] sm:$0xff] %v386
      %403 = vst [vmem:[#allocation12 + $0x28] sm:$0xff] %v387
      %404 = vst [vmem:[#allocation12 + $0x30] sm:$0xff] %v388
      %405 = vst [vmem:[#allocation12 + $0x38] sm:$0xff] %v389
      %406 = vst [vmem:[#allocation12 + $0x40] sm:$0xff] %v390
      %407 = vst [vmem:[#allocation12 + $0x48] sm:$0xff] %v391
      %408 = vst [vmem:[#allocation12 + $0x50] sm:$0xff] %v392
      %409 = vst [vmem:[#allocation12 + $0x58] sm:$0xff] %v393
      %410 = vst [vmem:[#allocation12 + $0x60] sm:$0xff] %v394
      %411 = vst [vmem:[#allocation12 + $0x68] sm:$0xff] %v395
      %412 = vst [vmem:[#allocation12 + $0x70] sm:$0xff] %v396
      %413 = vst [vmem:[#allocation12 + $0x78] sm:$0xff] %v397
    $region33: #{tpu_custom_call.1} parent=1 // pred_fallthru
      _
    // Predicated region
    $region34: #{tpu_custom_call.1} parent=1 // pred_check
      _
    $region35: #{tpu_custom_call.1} parent=1 // pred_check_branch
      %415 = sbr.rel (0) target = $region37
    $region36: #{tpu_custom_call.1} parent=1 // pred_region
      %s417 = ssub.s32 2048, 2048
      %418 = vsyncadd [#allocation9], %s417
      %s419 = sshll.u32 [#allocation12], 4
      %s420 = int_to_ptr.vmem [resolvable:$true] %s419
      %425 = dma.vmem_to_hbm [thread:$0]  %s420, 2048, %s5, [#allocation9], 128, 128, 8
    $region37: #{tpu_custom_call.1} parent=1 // pred_fallthru
      _
    // Predicated region
    $region38: #{tpu_custom_call.1} parent=1 // pred_check
      _
    $region39: #{tpu_custom_call.1} parent=1 // pred_check_branch
      %427 = sbr.rel (0) target = $region41
    $region40: #{tpu_custom_call.1} parent=1 // pred_region
      %428 = dma.done [#allocation9], 2048
    $region41: #{tpu_custom_call.1} parent=1 // pred_fallthru
      _
    %429 = vsyncpa [#allocation8], 1
    %430 = vsyncpa [#allocation11], 1
    %431 = vsyncpa [#allocation9], 1

</llo_original>
